<compile_context>
chip_gen: v5e
topology: v5e:2x2
jax: 0.10.0
libtpu: 0.0.40
codegen_flags: <defaults>
</compile_context>

<pallas_src>
import functools

import numpy as np
import jax
import jax.numpy as jnp
from jax.experimental import pallas as pl
from jax.experimental.pallas import tpu as pltpu


# --------------------------------------------------------------------------
# Pallas kernel: one row-tile of (TM, H) f32 activations per grid step.
# --------------------------------------------------------------------------
def pre_predictions_kernel(x_ref, w_ref, b_ref, out_ref, *, compute_dtype):
    # x_ref : (TM, H)   float32 streamed from HBM (cast to bf16 here, not in XLA)
    # w_ref : (8, H)    compute dtype; row 0 = w_e, row 1 = w_c, rows 2..7 = 0
    # b_ref : (2, 1)    float32;       row 0 = b_e, row 1 = b_c
    # out   : (2, TM)   float32, lane-dense
    x = x_ref[...].astype(compute_dtype)
    o = jax.lax.dot_general(
        w_ref[...], x,
        dimension_numbers=(((1,), (1,)), ((), ())),     # contract both last dims
        preferred_element_type=jnp.float32)             # (8, TM) f32 accumulate
    # Store only the two useful rows (4x less output write traffic than (8, TM)).
    out_ref[...] = o[0:2, :] + b_ref[...]


# --------------------------------------------------------------------------
# Forward wrapper.
# --------------------------------------------------------------------------
def pre_predictions_forward(doc_sents_h, params, *, tm=512,
                            compute_dtype=jnp.bfloat16):
    B, L, H = doc_sents_h.shape
    M = B * L
    assert tm % 128 == 0, "tm must be a multiple of 128 (lane-dense output store)"
    n_tiles = pl.cdiv(M, tm)
    M_pad = n_tiles * tm

    # Flatten only: no pad, no cast -> exactly one HBM pass over the f32
    # activations.  The ragged last tile relies on Pallas partial-block
    # masking; garbage rows only produce output columns >= M (sliced below).
    x = doc_sents_h.reshape(M, H)

    # Stack the two 1-row projections into an 8-sublane-aligned weight slab
    # (tiny, stays resident in VMEM via a constant index_map).
    w_stack = jnp.zeros((8, H), jnp.float32)
    w_stack = w_stack.at[0].set(params["w_e"]).at[1].set(params["w_c"])
    w_stack = w_stack.astype(compute_dtype)

    b_stack = jnp.zeros((2, 1), jnp.float32)
    b_stack = b_stack.at[0, 0].set(params["b_e"]).at[1, 0].set(params["b_c"])

    # VMEM budget: double-buffered streamed activations + double-buffered
    # output blocks + resident weight/bias slabs, with headroom.  Floor at
    # 32 MiB (raises v5e's 16 MiB scoped default), cap at 48 MiB (safe under
    # v7x's 64 MiB physical VMEM).
    need = (2 * tm * H * x.dtype.itemsize        # input double buffer
            + 2 * 2 * tm * 4                     # output double buffer
            + 8 * H * w_stack.dtype.itemsize     # weight slab
            + 2 * 4)                             # bias slab
    vmem_limit = int(min(max(2 * need, 32 << 20), 48 << 20))

    kernel = functools.partial(pre_predictions_kernel,
                               compute_dtype=compute_dtype)

    out = pl.pallas_call(
        kernel,
        out_shape=jax.ShapeDtypeStruct((2, M_pad), jnp.float32),
        grid_spec=pltpu.PrefetchScalarGridSpec(
            num_scalar_prefetch=0,
            grid=(n_tiles,),
            in_specs=[
                pl.BlockSpec((tm, H), lambda i: (i, 0)),   # streamed activations
                pl.BlockSpec((8, H), lambda i: (0, 0)),    # resident weight slab
                pl.BlockSpec((2, 1), lambda i: (0, 0)),    # resident bias slab
            ],
            out_specs=pl.BlockSpec((2, tm), lambda i: (0, i)),  # lane-dense out
        ),
        compiler_params=pltpu.CompilerParams(
            dimension_semantics=("parallel",),
            vmem_limit_bytes=vmem_limit),
    )(x, w_stack, b_stack)

    pred_e = out[0, :M].reshape(B, L)
    pred_c = out[1, :M].reshape(B, L)
    return pred_e, pred_c


# --------------------------------------------------------------------------
# Pure-JAX reference (same bf16 quantization of x / weights as the kernel,
# f32 accumulation and bias add).
# --------------------------------------------------------------------------
def pre_predictions_reference(doc_sents_h, params, compute_dtype=jnp.bfloat16):
    x = doc_sents_h.astype(compute_dtype).astype(jnp.float32)
    w_e = params["w_e"].astype(compute_dtype).astype(jnp.float32)
    w_c = params["w_c"].astype(compute_dtype).astype(jnp.float32)
    pred_e = jnp.einsum("blh,h->bl", x, w_e) + params["b_e"]
    pred_c = jnp.einsum("blh,h->bl", x, w_c) + params["b_c"]
    return pred_e, pred_c


def _make_inputs(key, B, L, H):
    k1, k2, k3, k4, k5 = jax.random.split(key, 5)
    doc_sents_h = jax.random.normal(k1, (B, L, H), jnp.float32)
    params = {
        # nn.Linear(H, 1): weight (1, H) stored squeezed as (H,), bias scalar.
        "w_e": jax.random.normal(k2, (H,), jnp.float32) / np.sqrt(H),
        "b_e": 0.01 * jax.random.normal(k3, (), jnp.float32),
        "w_c": jax.random.normal(k4, (H,), jnp.float32) / np.sqrt(H),
        "b_c": 0.01 * jax.random.normal(k5, (), jnp.float32),
    }
    return doc_sents_h, params


def _check(doc_sents_h, params, *, tm):
    B, L, _ = doc_sents_h.shape
    pred_e, pred_c = pre_predictions_forward(doc_sents_h, params, tm=tm)
    pred_e = jax.block_until_ready(pred_e)
    pred_c = jax.block_until_ready(pred_c)

    ref_e, ref_c = pre_predictions_reference(doc_sents_h, params)
    ref_e = jax.block_until_ready(ref_e)
    ref_c = jax.block_until_ready(ref_c)

    assert pred_e.shape == (B, L) and pred_c.shape == (B, L)
    np.testing.assert_allclose(np.asarray(pred_e), np.asarray(ref_e),
                               rtol=1e-4, atol=1e-4)
    np.testing.assert_allclose(np.asarray(pred_c), np.asarray(ref_c),
                               rtol=1e-4, atol=1e-4)


# --------------------------------------------------------------------------
# Main
# --------------------------------------------------------------------------
if __name__ == "__main__":
    key = jax.random.PRNGKey(0)
    k_a, k_b = jax.random.split(key, 2)

    # Case 1: small synthetic config (batch=2, seq=8 sentences, glm_hidden=32).
    # Single ragged tile (M=16 < tm=512): exercises partial-block input masking.
    doc_sents_h, params = _make_inputs(k_a, 2, 8, 32)
    _check(doc_sents_h, params, tm=512)

    # Case 2: multi-tile + ragged last tile (M=160, tm=128 -> 2 tiles, last
    # tile only 32 valid rows): exercises the tile-boundary path without padding.
    doc_sents_h2, params2 = _make_inputs(k_b, 4, 40, 32)
    _check(doc_sents_h2, params2, tm=128)

    print("KERNEL_OK")
</pallas_src>

<mosaic_0001>
module attributes {stable_mosaic.version = 11 : i64} {
  func.func @pre_predictions_kernel(%arg0: i32, %arg1: memref<512x32xf32, #tpu.memory_space<vmem>>, %arg2: memref<8x32xbf16, #tpu.memory_space<vmem>>, %arg3: memref<2x1xf32, #tpu.memory_space<vmem>>, %arg4: memref<2x512xf32, #tpu.memory_space<vmem>>) attributes {dimension_semantics = [#tpu.dimension_semantics<parallel>], iteration_bounds = array<i64: 1>, scalar_prefetch = 0 : i64, scratch_operands = 0 : i64, tpu.core_type = #tpu.core_type<tc>, window_params = [{transform_indices = @transform_0, window_bounds = array<i64: 512, 32>}, {pipeline_mode = #tpu.pipeline_mode<synchronous>, transform_indices = @transform_1, window_bounds = array<i64: 8, 32>}, {pipeline_mode = #tpu.pipeline_mode<synchronous>, transform_indices = @transform_2, window_bounds = array<i64: 2, 1>}, {transform_indices = @transform_3, window_bounds = array<i64: 2, 512>}]} {
    %c0 = arith.constant 0 : index
    %c0_0 = arith.constant 0 : index
    %0 = vector.load %arg1[%c0, %c0_0] : memref<512x32xf32, #tpu.memory_space<vmem>>, vector<512x32xf32>
    %1 = arith.truncf %0 : vector<512x32xf32> to vector<512x32xbf16>
    %c0_1 = arith.constant 0 : index
    %c0_2 = arith.constant 0 : index
    %2 = vector.load %arg2[%c0_1, %c0_2] : memref<8x32xbf16, #tpu.memory_space<vmem>>, vector<8x32xbf16>
    %cst = arith.constant dense<0.000000e+00> : vector<8x512xf32>
    %3 = tpu.matmul %2, %1, %cst {dimension_numbers = #tpu.dot_dimension_numbers<[1], [1], [0], [0], [0, 0, 1, 0], [], []>} : vector<8x32xbf16>, vector<512x32xbf16>, vector<8x512xf32> -> vector<8x512xf32>
    %4 = vector.extract_strided_slice %3 {offsets = [0, 0], sizes = [2, 512], strides = [1, 1]} : vector<8x512xf32> to vector<2x512xf32>
    %c0_3 = arith.constant 0 : index
    %c0_4 = arith.constant 0 : index
    %5 = vector.load %arg3[%c0_3, %c0_4] : memref<2x1xf32, #tpu.memory_space<vmem>>, vector<2x1xf32>
    %6 = vector.broadcast %5 : vector<2x1xf32> to vector<2x512xf32>
    %7 = arith.addf %4, %6 : vector<2x512xf32>
    %c0_5 = arith.constant 0 : index
    %c0_6 = arith.constant 0 : index
    %8 = vector.load %arg4[%c0_5, %c0_6] : memref<2x512xf32, #tpu.memory_space<vmem>>, vector<2x512xf32>
    tpu.vector_store %arg4[%c0_5, %c0_6], %7 {strides = array<i32>} : memref<2x512xf32, #tpu.memory_space<vmem>>, vector<2x512xf32>,
    return
  }
  func.func @transform_0(%arg0: i32) -> (i32, i32) {
    %c0_i32 = arith.constant 0 : i32
    %c0_i32_0 = arith.constant 0 : i32
    return %arg0, %c0_i32 : i32, i32
  }
  func.func @transform_1(%arg0: i32) -> (i32, i32) {
    %c0_i32 = arith.constant 0 : i32
    %c0_i32_0 = arith.constant 0 : i32
    %c0_i32_1 = arith.constant 0 : i32
    return %c0_i32, %c0_i32_0 : i32, i32
  }
  func.func @transform_2(%arg0: i32) -> (i32, i32) {
    %c0_i32 = arith.constant 0 : i32
    %c0_i32_0 = arith.constant 0 : i32
    %c0_i32_1 = arith.constant 0 : i32
    return %c0_i32, %c0_i32_0 : i32, i32
  }
  func.func @transform_3(%arg0: i32) -> (i32, i32) {
    %c0_i32 = arith.constant 0 : i32
    %c0_i32_0 = arith.constant 0 : i32
    return %c0_i32, %arg0 : i32, i32
  }
}

</mosaic_0001>

<llo_original>
// kernel: tpu_custom_call.1
$region0: #{tpu_custom_call.1}
  #allocation0 [shape = 'u32[]', space=smem, size = 0x4, offset = 0x4, fixed_abs, tag = 'smem constant byte address 0x4 - core index']
  #allocation1 [shape = 'u32[72,128]{1,0:T(1,128)}', space=vmem, size = 0x9000, scoped, tag = 'internal scratch']
  %s0 = inlined_call_operand.hbm [shape: f32[16,32], index: 0, kind: input, shape index: {}]
  %s1 = inlined_call_operand.hbm [shape: bf16[8,32], index: 1, kind: input, shape index: {}]
  %s2 = inlined_call_operand.vmem [shape: f32[2,1], index: 2, kind: input, shape index: {}]
  %s3 = inlined_call_operand.hbm [shape: f32[2,512], index: 3, kind: output, shape index: {}]
  %s4 = sld [smem:[#allocation0]]
  $region30: #{tpu_custom_call.1} parent=0
    _
  %s6 = ssub.s32 1, %s4
  %s7 = scalar_select 0, %s6, %s4
  $region1: #{tpu_custom_call.1} parent=0
    #allocation2 [shape = 'u8[262144]{0}', space=vmem, size = 0x40000, scoped, tag = 'input window, operand 0, single buffered']
    #allocation3 [shape = 's32[1]{0}', space=sflag, size = 0x4, scoped, tag = 'scoped memory for tpu_custom_call.1']
    #allocation4 [shape = 's32[1]{0}', space=sflag, size = 0x4, scoped, tag = 'scoped memory for tpu_custom_call.1']
    #allocation5 [shape = 'u8[2048]{0}', space=vmem, size = 0x800, scoped, tag = 'input window, operand 1, single buffered']
    #allocation6 [shape = 's32[1]{0}', space=sflag, size = 0x4, scoped, tag = 'scoped memory for tpu_custom_call.1']
    #allocation7 [shape = 'u8[4096]{0}', space=vmem, size = 0x1000, scoped, tag = 'output window, operand 0, single buffered']
    %8 = vsyncpa [#allocation3], 0
    %9 = vsyncpa [#allocation6], 0
    %10 = vsyncpa [#allocation4], 0
    // Predicated region
    $region2: #{tpu_custom_call.1} parent=1 // pred_check
      _
    $region3: #{tpu_custom_call.1} parent=1 // pred_check_branch
      %12 = sbr.rel (0) target = $region5
    $region4: #{tpu_custom_call.1} parent=1 // pred_region
      %14 = vsyncadd [#allocation3], 7936
      %s15 = sshll.u32 %s0, 4
      %s16 = int_to_ptr.hbm [resolvable:$true] %s15
      %s17 = sshll.u32 [#allocation2], 4
      %s18 = int_to_ptr.vmem [resolvable:$true] %s17
      %23 = dma.hbm_to_vmem [thread:$0]  %s16, 256, %s18, [#allocation3], 128, 128, 8
    $region5: #{tpu_custom_call.1} parent=1 // pred_fallthru
      _
    // Predicated region
    $region6: #{tpu_custom_call.1} parent=1 // pred_check
      _
    $region7: #{tpu_custom_call.1} parent=1 // pred_check_branch
      %25 = sbr.rel (0) target = $region9
    $region8: #{tpu_custom_call.1} parent=1 // pred_region
      %27 = vsyncadd [#allocation6], 0
      %s29 = sshll.u32 %s1, 4
      %s30 = int_to_ptr.hbm [resolvable:$true] %s29
      %s31 = sshll.u32 [#allocation5], 4
      %s32 = int_to_ptr.vmem [resolvable:$true] %s31
      %34 = dma.hbm_to_vmem [thread:$0]  %s30, 64, %s32, [#allocation6]
    $region9: #{tpu_custom_call.1} parent=1 // pred_fallthru
      _
    // Predicated region
    $region10: #{tpu_custom_call.1} parent=1 // pred_check
      _
    $region11: #{tpu_custom_call.1} parent=1 // pred_check_branch
      %36 = sbr.rel (0) target = $region13
    $region12: #{tpu_custom_call.1} parent=1 // pred_region
      _
    $region13: #{tpu_custom_call.1} parent=1 // pred_fallthru
      _
    // Predicated region
    $region14: #{tpu_custom_call.1} parent=1 // pred_check
      _
    $region15: #{tpu_custom_call.1} parent=1 // pred_check_branch
      %38 = sbr.rel (0) target = $region17
    $region16: #{tpu_custom_call.1} parent=1 // pred_region
      %40 = dma.done [#allocation3], 8192
    $region17: #{tpu_custom_call.1} parent=1 // pred_fallthru
      _
    // Predicated region
    $region18: #{tpu_custom_call.1} parent=1 // pred_check
      _
    $region19: #{tpu_custom_call.1} parent=1 // pred_check_branch
      %42 = sbr.rel (0) target = $region21
    $region20: #{tpu_custom_call.1} parent=1 // pred_region
      %44 = dma.done [#allocation6], 64
    $region21: #{tpu_custom_call.1} parent=1 // pred_fallthru
      _
    %v45 = vld [vmem:[#allocation2] sm:$0xff]
    %v46 = vld [vmem:[#allocation2 + $0x8] sm:$0xff]
    %v47 = vld [vmem:[#allocation2 + $0x10] sm:$0xff]
    %v48 = vld [vmem:[#allocation2 + $0x18] sm:$0xff]
    %v49 = vld [vmem:[#allocation2 + $0x20] sm:$0xff]
    %v50 = vld [vmem:[#allocation2 + $0x28] sm:$0xff]
    %v51 = vld [vmem:[#allocation2 + $0x30] sm:$0xff]
    %v52 = vld [vmem:[#allocation2 + $0x38] sm:$0xff]
    %v53 = vld [vmem:[#allocation2 + $0x40] sm:$0xff]
    %v54 = vld [vmem:[#allocation2 + $0x48] sm:$0xff]
    %v55 = vld [vmem:[#allocation2 + $0x50] sm:$0xff]
    %v56 = vld [vmem:[#allocation2 + $0x58] sm:$0xff]
    %v57 = vld [vmem:[#allocation2 + $0x60] sm:$0xff]
    %v58 = vld [vmem:[#allocation2 + $0x68] sm:$0xff]
    %v59 = vld [vmem:[#allocation2 + $0x70] sm:$0xff]
    %v60 = vld [vmem:[#allocation2 + $0x78] sm:$0xff]
    %v61 = vld [vmem:[#allocation2 + $0x80] sm:$0xff]
    %v62 = vld [vmem:[#allocation2 + $0x88] sm:$0xff]
    %v63 = vld [vmem:[#allocation2 + $0x90] sm:$0xff]
    %v64 = vld [vmem:[#allocation2 + $0x98] sm:$0xff]
    %v65 = vld [vmem:[#allocation2 + $0xa0] sm:$0xff]
    %v66 = vld [vmem:[#allocation2 + $0xa8] sm:$0xff]
    %v67 = vld [vmem:[#allocation2 + $0xb0] sm:$0xff]
    %v68 = vld [vmem:[#allocation2 + $0xb8] sm:$0xff]
    %v69 = vld [vmem:[#allocation2 + $0xc0] sm:$0xff]
    %v70 = vld [vmem:[#allocation2 + $0xc8] sm:$0xff]
    %v71 = vld [vmem:[#allocation2 + $0xd0] sm:$0xff]
    %v72 = vld [vmem:[#allocation2 + $0xd8] sm:$0xff]
    %v73 = vld [vmem:[#allocation2 + $0xe0] sm:$0xff]
    %v74 = vld [vmem:[#allocation2 + $0xe8] sm:$0xff]
    %v75 = vld [vmem:[#allocation2 + $0xf0] sm:$0xff]
    %v76 = vld [vmem:[#allocation2 + $0xf8] sm:$0xff]
    %v77 = vld [vmem:[#allocation2 + $0x100] sm:$0xff]
    %v78 = vld [vmem:[#allocation2 + $0x108] sm:$0xff]
    %v79 = vld [vmem:[#allocation2 + $0x110] sm:$0xff]
    %v80 = vld [vmem:[#allocation2 + $0x118] sm:$0xff]
    %v81 = vld [vmem:[#allocation2 + $0x120] sm:$0xff]
    %v82 = vld [vmem:[#allocation2 + $0x128] sm:$0xff]
    %v83 = vld [vmem:[#allocation2 + $0x130] sm:$0xff]
    %v84 = vld [vmem:[#allocation2 + $0x138] sm:$0xff]
    %v85 = vld [vmem:[#allocation2 + $0x140] sm:$0xff]
    %v86 = vld [vmem:[#allocation2 + $0x148] sm:$0xff]
    %v87 = vld [vmem:[#allocation2 + $0x150] sm:$0xff]
    %v88 = vld [vmem:[#allocation2 + $0x158] sm:$0xff]
    %v89 = vld [vmem:[#allocation2 + $0x160] sm:$0xff]
    %v90 = vld [vmem:[#allocation2 + $0x168] sm:$0xff]
    %v91 = vld [vmem:[#allocation2 + $0x170] sm:$0xff]
    %v92 = vld [vmem:[#allocation2 + $0x178] sm:$0xff]
    %v93 = vld [vmem:[#allocation2 + $0x180] sm:$0xff]
    %v94 = vld [vmem:[#allocation2 + $0x188] sm:$0xff]
    %v95 = vld [vmem:[#allocation2 + $0x190] sm:$0xff]
    %v96 = vld [vmem:[#allocation2 + $0x198] sm:$0xff]
    %v97 = vld [vmem:[#allocation2 + $0x1a0] sm:$0xff]
    %v98 = vld [vmem:[#allocation2 + $0x1a8] sm:$0xff]
    %v99 = vld [vmem:[#allocation2 + $0x1b0] sm:$0xff]
    %v100 = vld [vmem:[#allocation2 + $0x1b8] sm:$0xff]
    %v101 = vld [vmem:[#allocation2 + $0x1c0] sm:$0xff]
    %v102 = vld [vmem:[#allocation2 + $0x1c8] sm:$0xff]
    %v103 = vld [vmem:[#allocation2 + $0x1d0] sm:$0xff]
    %v104 = vld [vmem:[#allocation2 + $0x1d8] sm:$0xff]
    %v105 = vld [vmem:[#allocation2 + $0x1e0] sm:$0xff]
    %v106 = vld [vmem:[#allocation2 + $0x1e8] sm:$0xff]
    %v107 = vld [vmem:[#allocation2 + $0x1f0] sm:$0xff]
    %v108 = vld [vmem:[#allocation2 + $0x1f8] sm:$0xff]
    %v109 = vpack.c.bf16 %v46, %v45
    %v110 = vpack.c.bf16 %v48, %v47
    %v111 = vpack.c.bf16 %v50, %v49
    %v112 = vpack.c.bf16 %v52, %v51
    %v113 = vpack.c.bf16 %v54, %v53
    %v114 = vpack.c.bf16 %v56, %v55
    %v115 = vpack.c.bf16 %v58, %v57
    %v116 = vpack.c.bf16 %v60, %v59
    %v117 = vpack.c.bf16 %v62, %v61
    %v118 = vpack.c.bf16 %v64, %v63
    %v119 = vpack.c.bf16 %v66, %v65
    %v120 = vpack.c.bf16 %v68, %v67
    %v121 = vpack.c.bf16 %v70, %v69
    %v122 = vpack.c.bf16 %v72, %v71
    %v123 = vpack.c.bf16 %v74, %v73
    %v124 = vpack.c.bf16 %v76, %v75
    %v125 = vpack.c.bf16 %v78, %v77
    %v126 = vpack.c.bf16 %v80, %v79
    %v127 = vpack.c.bf16 %v82, %v81
    %v128 = vpack.c.bf16 %v84, %v83
    %v129 = vpack.c.bf16 %v86, %v85
    %v130 = vpack.c.bf16 %v88, %v87
    %v131 = vpack.c.bf16 %v90, %v89
    %v132 = vpack.c.bf16 %v92, %v91
    %v133 = vpack.c.bf16 %v94, %v93
    %v134 = vpack.c.bf16 %v96, %v95
    %v135 = vpack.c.bf16 %v98, %v97
    %v136 = vpack.c.bf16 %v100, %v99
    %v137 = vpack.c.bf16 %v102, %v101
    %v138 = vpack.c.bf16 %v104, %v103
    %v139 = vpack.c.bf16 %v106, %v105
    %v140 = vpack.c.bf16 %v108, %v107
    %v141 = vld [vmem:[#allocation5] sm:$0xf]
    %vm142 = vcmask 261120
    %v144 = vsel %vm142, %v141, 0
    %v147 = vsel %vm142, %v109, 0
    %v150 = vsel %vm142, %v110, 0
    %v153 = vsel %vm142, %v111, 0
    %v156 = vsel %vm142, %v112, 0
    %v159 = vsel %vm142, %v113, 0
    %v162 = vsel %vm142, %v114, 0
    %v165 = vsel %vm142, %v115, 0
    %v168 = vsel %vm142, %v116, 0
    %v171 = vsel %vm142, %v117, 0
    %v174 = vsel %vm142, %v118, 0
    %v177 = vsel %vm142, %v119, 0
    %v180 = vsel %vm142, %v120, 0
    %v183 = vsel %vm142, %v121, 0
    %v186 = vsel %vm142, %v122, 0
    %v189 = vsel %vm142, %v123, 0
    %v192 = vsel %vm142, %v124, 0
    %v195 = vsel %vm142, %v125, 0
    %v198 = vsel %vm142, %v126, 0
    %v201 = vsel %vm142, %v127, 0
    %v204 = vsel %vm142, %v128, 0
    %v207 = vsel %vm142, %v129, 0
    %v210 = vsel %vm142, %v130, 0
    %v213 = vsel %vm142, %v131, 0
    %v216 = vsel %vm142, %v132, 0
    %v219 = vsel %vm142, %v133, 0
    %v222 = vsel %vm142, %v134, 0
    %v225 = vsel %vm142, %v135, 0
    %v228 = vsel %vm142, %v136, 0
    %v231 = vsel %vm142, %v137, 0
    %v234 = vsel %vm142, %v138, 0
    %v237 = vsel %vm142, %v139, 0
    %v240 = vsel %vm142, %v140, 0
    %242 = vmatpush.bf16.xpose.msra.mxu0 %v168
    %243 = vmatpush.bf16.xpose.msra.mxu0 %v165
    %244 = vmatpush.bf16.xpose.msra.mxu0 %v162
    %245 = vmatpush.bf16.xpose.msra.mxu0 %v159
    %246 = vmatpush.bf16.xpose.msra.mxu0 %v156
    %247 = vmatpush.bf16.xpose.msra.mxu0 %v153
    %248 = vmatpush.bf16.xpose.msra.mxu0 %v150
    %249 = vmatpush.bf16.xpose.msra.mxu0 %v147
    %250 = vmatmul.bf16.gmra.mxu0 %v144
    %v251 = vpop.f32.mrf.mxu0
    %v252 = vadd.f32 0.0, %v251
    %v253 = vpop.f32.mrf.mxu0
    %254 = vdwg.mxu0
    %255 = vmatpush.bf16.xpose.msra.mxu0 %v192
    %256 = vmatpush.bf16.xpose.msra.mxu0 %v189
    %257 = vmatpush.bf16.xpose.msra.mxu0 %v186
    %258 = vmatpush.bf16.xpose.msra.mxu0 %v183
    %259 = vmatpush.bf16.xpose.msra.mxu0 %v180
    %260 = vmatpush.bf16.xpose.msra.mxu0 %v177
    %261 = vmatpush.bf16.xpose.msra.mxu0 %v174
    %262 = vmatpush.bf16.xpose.msra.mxu0 %v171
    %263 = vmatmul.bf16.gmra.mxu0 %v144
    %v264 = vpop.f32.mrf.mxu0
    %v265 = vadd.f32 0.0, %v264
    %v266 = vpop.f32.mrf.mxu0
    %267 = vdwg.mxu0
    %268 = vmatpush.bf16.xpose.msra.mxu0 %v216
    %269 = vmatpush.bf16.xpose.msra.mxu0 %v213
    %270 = vmatpush.bf16.xpose.msra.mxu0 %v210
    %271 = vmatpush.bf16.xpose.msra.mxu0 %v207
    %272 = vmatpush.bf16.xpose.msra.mxu0 %v204
    %273 = vmatpush.bf16.xpose.msra.mxu0 %v201
    %274 = vmatpush.bf16.xpose.msra.mxu0 %v198
    %275 = vmatpush.bf16.xpose.msra.mxu0 %v195
    %276 = vmatmul.bf16.gmra.mxu0 %v144
    %v277 = vpop.f32.mrf.mxu0
    %v278 = vadd.f32 0.0, %v277
    %v279 = vpop.f32.mrf.mxu0
    %280 = vdwg.mxu0
    %281 = vmatpush.bf16.xpose.msra.mxu0 %v240
    %282 = vmatpush.bf16.xpose.msra.mxu0 %v237
    %283 = vmatpush.bf16.xpose.msra.mxu0 %v234
    %284 = vmatpush.bf16.xpose.msra.mxu0 %v231
    %285 = vmatpush.bf16.xpose.msra.mxu0 %v228
    %286 = vmatpush.bf16.xpose.msra.mxu0 %v225
    %287 = vmatpush.bf16.xpose.msra.mxu0 %v222
    %288 = vmatpush.bf16.xpose.msra.mxu0 %v219
    %289 = vmatmul.bf16.gmra.mxu0 %v144
    %v290 = vpop.f32.mrf.mxu0
    %v291 = vadd.f32 0.0, %v290
    %v292 = vpop.f32.mrf.mxu0
    %293 = vdwg.mxu0
    %v294 = vld [vmem:[%s2] sm:$0x3]
    %296 = vset.pattern.permute.xlu0 0
    %297 = vperm.xlu0 %296, %v294
    %v298 = vpop.permute.xlu0 %297
    %v300 = vadd.f32 %v252, %v298
    %v301 = vadd.f32 %v265, %v298
    %v302 = vadd.f32 %v278, %v298
    %v303 = vadd.f32 %v291, %v298
    %v308 = vrot.slane %v301, 6
    %v309 = vrot.slane %v302, 4
    %v310 = vrot.slane %v303, 2
    %vm311 = vcmask 1041408
    %v312 = vsel %vm311, %v300, %v308
    %vm313 = vcmask 1045508
    %v314 = vsel %vm313, %v309, %v310
    %vm315 = vcmask 1043456
    %v316 = vsel %vm315, %v312, %v314
    %318 = vst [vmem:[#allocation7] sm:$0xff] %v316
    // Predicated region
    $region22: #{tpu_custom_call.1} parent=1 // pred_check
      _
    $region23: #{tpu_custom_call.1} parent=1 // pred_check_branch
      %320 = sbr.rel (0) target = $region25
    $region24: #{tpu_custom_call.1} parent=1 // pred_region
      %322 = vsyncadd [#allocation4], 0
      %s324 = sshll.u32 [#allocation7], 4
      %s325 = int_to_ptr.vmem [resolvable:$true] %s324
      %s326 = sshll.u32 %s3, 4
      %s327 = int_to_ptr.hbm [resolvable:$true] %s326
      %329 = dma.vmem_to_hbm [thread:$0]  %s325, 128, %s327, [#allocation4]
    $region25: #{tpu_custom_call.1} parent=1 // pred_fallthru
      _
    // Predicated region
    $region26: #{tpu_custom_call.1} parent=1 // pred_check
      _
    $region27: #{tpu_custom_call.1} parent=1 // pred_check_branch
      %331 = sbr.rel (0) target = $region29
    $region28: #{tpu_custom_call.1} parent=1 // pred_region
      %333 = dma.done [#allocation4], 128
    $region29: #{tpu_custom_call.1} parent=1 // pred_fallthru
      _
    %334 = vsyncpa [#allocation3], 1
    %335 = vsyncpa [#allocation6], 1
    %336 = vsyncpa [#allocation4], 1

</llo_original>
